<compile_context>
chip_gen: v5e
topology: v5e:2x2
jax: 0.10.0
libtpu: 0.0.40
codegen_flags: <defaults>
</compile_context>

<pallas_src>
import functools

import jax
import jax.numpy as jnp
from jax import lax
from jax.experimental import pallas as pl
from jax.experimental.pallas import tpu as pltpu


# --------------------------------------------------------------------------- #
# Fused kernel: conv (im2col matmul) + folded-BN shift + ReLU + 3x3/s2/p1 max pool.
# --------------------------------------------------------------------------- #
def _hpool_evod(y, pw):
    """3-tap / stride-2 horizontal max on [evens | odds]-permuted width (post-ReLU >= 0)."""
    ev = y[..., :pw, :]                       # conv col 2j
    od = y[..., pw:, :]                       # conv col 2j+1
    ax = y.ndim - 2                           # width lives on the sublane axis
    od_prev = jnp.where(                      # conv col 2j-1; zero at j==0 is exact because
        lax.broadcasted_iota(jnp.int32, od.shape, ax) == 0,   # pooling strictly follows ReLU
        0.0,
        pltpu.roll(od, shift=1, axis=ax))
    return jnp.maximum(jnp.maximum(ev, od), od_prev)


def stem_fused_kernel(patches_ref, halo_ref, w_ref, shift_ref, out_ref):
    # patches_ref: (1, TH, OW, K) bf16, width pre-permuted to [even cols | odd cols]
    # halo_ref:    (1, 1, OW, K) bf16 -- patches of conv row t*TH-1 (dummy entry for t == 0)
    # w_ref:       (K, CP) bf16 with the BN scale pre-folded    shift_ref: (1, CP) f32
    # out_ref:     (1, TH//2, PW, CP)
    _, th, ow, k = patches_ref.shape
    cp = w_ref.shape[1]
    pw = ow // 2
    nq = th // 2
    t = pl.program_id(1)

    w = w_ref[...]
    shift = shift_ref[...]

    def conv_bn_relu(p):                                   # (rows, K) -> (rows, CP)
        y = jnp.dot(p, w, preferred_element_type=jnp.float32)
        return jnp.maximum(y + shift, 0.0)

    # ---- conv as one MXU matmul (bf16 in, f32 accumulate) + BN shift + ReLU ----
    # OW is a multiple of the sublane tile for standard stems, so this reshape is free.
    y = conv_bn_relu(patches_ref[0].reshape(th * ow, k)).reshape(th, ow, cp)
    hp = _hpool_evod(y, pw)                                # (th, pw, cp)

    # halo conv row t*TH-1; at t == 0 it is the pool's zero-padding row
    y_h = conv_bn_relu(halo_ref[0, 0])                     # (ow, cp)
    hp_h = jnp.where(t == 0, 0.0, _hpool_evod(y_h, pw))    # (pw, cp)

    # ---- vertical 3-tap / stride-2 max: one bulk lane-dense store + one halo-row store ----
    hp4 = hp.reshape(nq, 2, pw, cp)                        # leading-dim split: free
    mb = jnp.maximum(hp4[:, 0], hp4[:, 1])                 # max(conv rows 2q, 2q+1)
    out_ref[0, 0] = jnp.maximum(mb[0], hp_h).astype(out_ref.dtype)
    if nq > 1:                                             # static
        out_ref[0, 1:] = jnp.maximum(mb[1:], hp4[:nq - 1, 1]).astype(out_ref.dtype)


# --------------------------------------------------------------------------- #
# Wrapper: BaseStem.forward (PyTorch NCHW in; NCHW out by default).
# --------------------------------------------------------------------------- #
def _pick_row_tile(oh, ow, target_rows=4096):
    best = 2
    for cand in range(2, oh + 1, 2):
        if oh % cand == 0 and cand * ow <= target_rows:
            best = cand
    return best


def base_stem_forward(x_nchw, w_oihw, gamma, beta, run_mean, run_var, eps=1e-5,
                      row_tile=None, out_dtype=jnp.bfloat16, channels_last=False):
    N, Cin, H, W = x_nchw.shape
    Cout, _, KH, KW = w_oihw.shape
    S, P = 2, 3
    OH = (H + 2 * P - KH) // S + 1
    OW = (W + 2 * P - KW) // S + 1
    K = KH * KW * Cin
    CP = 128                                  # lane-pad Cout -> full 128-lane stores
    assert OH % 2 == 0 and OW % 2 == 0, "stem expects even conv output dims"
    PH, PW = OH // 2, OW // 2

    TH = _pick_row_tile(OH, OW) if row_tile is None else row_tile
    assert TH % 2 == 0 and OH % TH == 0
    T = OH // TH

    # ---- XLA glue: NCHW -> NHWC, zero pad, bf16 im2col with the width order built
    # directly as [even conv cols | odd conv cols] (pure slicing -> fuses into producer).
    x = jnp.transpose(x_nchw, (0, 2, 3, 1)).astype(jnp.bfloat16)
    x_pad = jnp.pad(x, ((0, 0), (P, P), (P, P), (0, 0)))
    ev, od = [], []
    for kh in range(KH):
        rows = x_pad[:, kh:kh + S * OH:S]                                 # (N, OH, W+6, Cin)
        for kw in range(KW):
            ev.append(rows[:, :, kw:kw + 2 * S * PW:2 * S, :])            # conv cols 0,2,...
            od.append(rows[:, :, kw + S:kw + S + 2 * S * PW:2 * S, :])    # conv cols 1,3,...
    p_ev = jnp.stack(ev, axis=3).reshape(N, OH, PW, K)
    p_od = jnp.stack(od, axis=3).reshape(N, OH, PW, K)
    patches = jnp.concatenate([p_ev, p_od], axis=2)                       # (N, OH, OW, K)

    # per-tile pool halo: patches of conv row t*TH-1 (t == 0 entry is a dummy; the kernel
    # substitutes the pool's zero-padding row there).  Strided slice -> ~1/TH extra traffic.
    if T > 1:
        halo = jnp.concatenate([patches[:, :1], patches[:, TH - 1:OH - 1:TH]], axis=1)
    else:
        halo = patches[:, :1]                                             # (N, T, OW, K)

    # frozen / eval BatchNorm: scale folded into the conv weights, only shift kept
    inv = gamma / jnp.sqrt(run_var + eps)
    w = jnp.transpose(w_oihw * inv[:, None, None, None], (2, 3, 1, 0)).reshape(K, Cout)
    w = jnp.pad(w, ((0, 0), (0, CP - Cout))).astype(jnp.bfloat16)
    shift = jnp.pad(beta - run_mean * inv, (0, CP - Cout)).reshape(1, CP).astype(jnp.float32)

    out = pl.pallas_call(
        stem_fused_kernel,
        out_shape=jax.ShapeDtypeStruct((N, PH, PW, CP), out_dtype),
        grid=(N, T),
        in_specs=[
            # TODO(synk): on v7x, add pipeline_mode=pl.Buffered(3) here if the profile shows
            # exposed DMA on the patches stream.
            pl.BlockSpec((1, TH, OW, K), lambda n, t: (n, t, 0, 0)),
            pl.BlockSpec((1, 1, OW, K), lambda n, t: (n, t, 0, 0)),
            pl.BlockSpec((K, CP), lambda n, t: (0, 0)),      # resident BN-folded weights
            pl.BlockSpec((1, CP), lambda n, t: (0, 0)),      # resident BN shift
        ],
        out_specs=pl.BlockSpec((1, TH // 2, PW, CP), lambda n, t: (n, t, 0, 0)),
        compiler_params=pltpu.CompilerParams(
            dimension_semantics=("parallel", "parallel"),    # feeds both v7x TensorCores
            vmem_limit_bytes=48 * 1024 * 1024),              # v5e default (16 MiB) too low
    )(patches, halo, w, shift)

    out = out[..., :Cout]
    if channels_last:
        return out                                           # NHWC: no extra layout pass
    return jnp.transpose(out, (0, 3, 1, 2))                  # NCHW (module semantics)


# --------------------------------------------------------------------------- #
if __name__ == "__main__":
    key = jax.random.PRNGKey(0)
    k1, k2, k3, k4, k5, k6 = jax.random.split(key, 6)

    N, Cin, H, W = 2, 3, 32, 32          # conv1 requires 3 input channels
    Cout, KH, KW = 64, 7, 7
    eps = 1e-5

    x = jax.random.normal(k1, (N, Cin, H, W), dtype=jnp.float32)

    # nn.init.kaiming_uniform_(w, a=1): U(-b, b), b = sqrt(6 / ((1 + a^2) * fan_in))
    fan_in = Cin * KH * KW
    bound = (3.0 / fan_in) ** 0.5
    w = jax.random.uniform(k2, (Cout, Cin, KH, KW), jnp.float32, -bound, bound)

    # deterministic (frozen/eval) BatchNorm parameters
    gamma = 1.0 + 0.1 * jax.random.normal(k3, (Cout,), dtype=jnp.float32)
    beta = 0.1 * jax.random.normal(k4, (Cout,), dtype=jnp.float32)
    run_mean = 0.1 * jax.random.normal(k5, (Cout,), dtype=jnp.float32)
    run_var = jax.random.uniform(k6, (Cout,), jnp.float32, 0.5, 1.5)

    # pure-JAX f32 reference (BaseStem.forward with eval-mode BN semantics)
    conv = lax.conv_general_dilated(x, w, (2, 2), ((3, 3), (3, 3)),
                                    dimension_numbers=("NCHW", "OIHW", "NCHW"))
    bn = ((conv - run_mean[None, :, None, None])
          / jnp.sqrt(run_var + eps)[None, :, None, None]
          * gamma[None, :, None, None] + beta[None, :, None, None])
    act = jnp.maximum(bn, 0.0)
    ref = lax.reduce_window(act, -jnp.inf, lax.max,
                            (1, 1, 3, 3), (1, 1, 2, 2),
                            ((0, 0), (0, 0), (1, 1), (1, 1)))

    # row_tile=4 exercises the multi-row-tile halo path (bf16 output);
    # row_tile=None uses the auto whole-image tile (f32 output).
    for rt, dt in ((4, jnp.bfloat16), (None, jnp.float32)):
        fwd = jax.jit(functools.partial(base_stem_forward, eps=eps,
                                        row_tile=rt, out_dtype=dt))
        out = jax.block_until_ready(fwd(x, w, gamma, beta, run_mean, run_var))
        assert out.shape == (N, Cout, H // 4, W // 4), out.shape
        # bf16 patch/weight stream (f32 accumulate) -> loosened tolerance vs f32 reference
        err = float(jnp.max(jnp.abs(out.astype(jnp.float32) - ref)))
        assert jnp.allclose(out.astype(jnp.float32), ref, atol=5e-2, rtol=5e-2), err
    print("KERNEL_OK")
</pallas_src>

<mosaic_0001>
module attributes {stable_mosaic.version = 11 : i64} {
  func.func @stem_fused_kernel(%arg0: i32, %arg1: i32, %arg2: memref<1x4x16x147xbf16, #tpu.memory_space<vmem>>, %arg3: memref<1x1x16x147xbf16, #tpu.memory_space<vmem>>, %arg4: memref<147x128xbf16, #tpu.memory_space<vmem>>, %arg5: memref<1x128xf32, #tpu.memory_space<vmem>>, %arg6: memref<1x2x8x128xbf16, #tpu.memory_space<vmem>>) attributes {dimension_semantics = [#tpu.dimension_semantics<parallel>, #tpu.dimension_semantics<parallel>], iteration_bounds = array<i64: 2, 4>, scalar_prefetch = 0 : i64, scratch_operands = 0 : i64, tpu.core_type = #tpu.core_type<tc>, window_params = [{transform_indices = @transform_0, window_bounds = array<i64: 1, 4, 16, 147>}, {transform_indices = @transform_1, window_bounds = array<i64: 1, 1, 16, 147>}, {pipeline_mode = #tpu.pipeline_mode<synchronous>, transform_indices = @transform_2, window_bounds = array<i64: 147, 128>}, {pipeline_mode = #tpu.pipeline_mode<synchronous>, transform_indices = @transform_3, window_bounds = array<i64: 1, 128>}, {transform_indices = @transform_4, window_bounds = array<i64: 1, 2, 8, 128>}]} {
    %c0 = arith.constant 0 : index
    %c0_0 = arith.constant 0 : index
    %0 = vector.load %arg4[%c0, %c0_0] : memref<147x128xbf16, #tpu.memory_space<vmem>>, vector<147x128xbf16>
    %c0_1 = arith.constant 0 : index
    %c0_2 = arith.constant 0 : index
    %1 = vector.load %arg5[%c0_1, %c0_2] : memref<1x128xf32, #tpu.memory_space<vmem>>, vector<1x128xf32>
    %c0_3 = arith.constant 0 : index
    %c0_4 = arith.constant 0 : index
    %c0_5 = arith.constant 0 : index
    %c0_6 = arith.constant 0 : index
    %2 = vector.load %arg2[%c0_3, %c0_4, %c0_5, %c0_6] : memref<1x4x16x147xbf16, #tpu.memory_space<vmem>>, vector<1x4x16x147xbf16>
    %3 = vector.shape_cast %2 : vector<1x4x16x147xbf16> to vector<4x16x147xbf16>
    %4 = vector.shape_cast %3 : vector<4x16x147xbf16> to vector<64x147xbf16>
    %cst = arith.constant dense<0.000000e+00> : vector<64x128xf32>
    %5 = tpu.matmul %4, %0, %cst {dimension_numbers = #tpu.dot_dimension_numbers<[1], [0], [0], [1], [0, 0, 1, 1], [], []>} : vector<64x147xbf16>, vector<147x128xbf16>, vector<64x128xf32> -> vector<64x128xf32>
    %6 = vector.broadcast %1 : vector<1x128xf32> to vector<64x128xf32>
    %7 = arith.addf %5, %6 : vector<64x128xf32>
    %cst_7 = arith.constant 0.000000e+00 : f32
    %8 = vector.broadcast %cst_7 : f32 to vector<64x128xf32>
    %9 = arith.maximumf %7, %8 : vector<64x128xf32>
    %10 = vector.shape_cast %9 : vector<64x128xf32> to vector<4x16x128xf32>
    %11 = vector.extract_strided_slice %10 {offsets = [0, 0, 0], sizes = [4, 8, 128], strides = [1, 1, 1]} : vector<4x16x128xf32> to vector<4x8x128xf32>
    %12 = vector.extract_strided_slice %10 {offsets = [0, 8, 0], sizes = [4, 8, 128], strides = [1, 1, 1]} : vector<4x16x128xf32> to vector<4x8x128xf32>
    %13 = tpu.iota {dimensions = array<i32: 1>} : vector<4x8x128xi32>
    %c0_i32 = arith.constant 0 : i32
    %14 = vector.broadcast %c0_i32 : i32 to vector<4x8x128xi32>
    %15 = arith.cmpi eq, %13, %14 : vector<4x8x128xi32>
    %c1_i32 = arith.constant 1 : i32
    %16 = tpu.dynamic_rotate %12 by %c1_i32 dim 1 : vector<4x8x128xf32>, i32 -> vector<4x8x128xf32>
    %cst_8 = arith.constant 0.000000e+00 : f32
    %17 = vector.broadcast %cst_8 : f32 to vector<4x8x128xf32>
    %18 = arith.select %15, %17, %16 : vector<4x8x128xi1>, vector<4x8x128xf32>
    %19 = arith.maximumf %11, %12 : vector<4x8x128xf32>
    %20 = arith.maximumf %19, %18 : vector<4x8x128xf32>
    %c0_9 = arith.constant 0 : index
    %c0_10 = arith.constant 0 : index
    %c0_11 = arith.constant 0 : index
    %c0_12 = arith.constant 0 : index
    %21 = vector.load %arg3[%c0_9, %c0_10, %c0_11, %c0_12] : memref<1x1x16x147xbf16, #tpu.memory_space<vmem>>, vector<1x1x16x147xbf16>
    %22 = vector.shape_cast %21 : vector<1x1x16x147xbf16> to vector<16x147xbf16>
    %cst_13 = arith.constant dense<0.000000e+00> : vector<16x128xf32>
    %23 = tpu.matmul %22, %0, %cst_13 {dimension_numbers = #tpu.dot_dimension_numbers<[1], [0], [0], [1], [0, 0, 1, 1], [], []>} : vector<16x147xbf16>, vector<147x128xbf16>, vector<16x128xf32> -> vector<16x128xf32>
    %24 = vector.broadcast %1 : vector<1x128xf32> to vector<16x128xf32>
    %25 = arith.addf %23, %24 : vector<16x128xf32>
    %cst_14 = arith.constant 0.000000e+00 : f32
    %26 = vector.broadcast %cst_14 : f32 to vector<16x128xf32>
    %27 = arith.maximumf %25, %26 : vector<16x128xf32>
    %c0_i32_15 = arith.constant 0 : i32
    %28 = arith.cmpi eq, %arg1, %c0_i32_15 : i32
    %29 = vector.extract_strided_slice %27 {offsets = [0, 0], sizes = [8, 128], strides = [1, 1]} : vector<16x128xf32> to vector<8x128xf32>
    %30 = vector.extract_strided_slice %27 {offsets = [8, 0], sizes = [8, 128], strides = [1, 1]} : vector<16x128xf32> to vector<8x128xf32>
    %31 = tpu.iota {dimensions = array<i32: 0>} : vector<8x128xi32>
    %c0_i32_16 = arith.constant 0 : i32
    %32 = vector.broadcast %c0_i32_16 : i32 to vector<8x128xi32>
    %33 = arith.cmpi eq, %31, %32 : vector<8x128xi32>
    %c1_i32_17 = arith.constant 1 : i32
    %34 = tpu.dynamic_rotate %30 by %c1_i32_17 dim 0 : vector<8x128xf32>, i32 -> vector<8x128xf32>
    %cst_18 = arith.constant 0.000000e+00 : f32
    %35 = vector.broadcast %cst_18 : f32 to vector<8x128xf32>
    %36 = arith.select %33, %35, %34 : vector<8x128xi1>, vector<8x128xf32>
    %37 = arith.maximumf %29, %30 : vector<8x128xf32>
    %38 = arith.maximumf %37, %36 : vector<8x128xf32>
    %cst_19 = arith.constant 0.000000e+00 : f32
    %39 = vector.broadcast %cst_19 : f32 to vector<8x128xf32>
    %40 = arith.select %28, %39, %38 : vector<8x128xf32>
    %41 = vector.shape_cast %20 : vector<4x8x128xf32> to vector<2x2x8x128xf32>
    %42 = vector.extract_strided_slice %41 {offsets = [0, 0, 0, 0], sizes = [2, 1, 8, 128], strides = [1, 1, 1, 1]} : vector<2x2x8x128xf32> to vector<2x1x8x128xf32>
    %43 = vector.shape_cast %42 : vector<2x1x8x128xf32> to vector<2x8x128xf32>
    %44 = vector.extract_strided_slice %41 {offsets = [0, 1, 0, 0], sizes = [2, 1, 8, 128], strides = [1, 1, 1, 1]} : vector<2x2x8x128xf32> to vector<2x1x8x128xf32>
    %45 = vector.shape_cast %44 : vector<2x1x8x128xf32> to vector<2x8x128xf32>
    %46 = arith.maximumf %43, %45 : vector<2x8x128xf32>
    %47 = vector.extract_strided_slice %46 {offsets = [0, 0, 0], sizes = [1, 8, 128], strides = [1, 1, 1]} : vector<2x8x128xf32> to vector<1x8x128xf32>
    %48 = vector.shape_cast %47 : vector<1x8x128xf32> to vector<8x128xf32>
    %49 = arith.maximumf %48, %40 : vector<8x128xf32>
    %50 = arith.truncf %49 : vector<8x128xf32> to vector<8x128xbf16>
    %c0_20 = arith.constant 0 : index
    %c0_21 = arith.constant 0 : index
    %c0_22 = arith.constant 0 : index
    %c0_23 = arith.constant 0 : index
    %51 = vector.load %arg6[%c0_20, %c0_21, %c0_22, %c0_23] : memref<1x2x8x128xbf16, #tpu.memory_space<vmem>>, vector<1x1x8x128xbf16>
    %52 = vector.shape_cast %51 : vector<1x1x8x128xbf16> to vector<8x128xbf16>
    %53 = vector.shape_cast %50 : vector<8x128xbf16> to vector<1x1x8x128xbf16>
    tpu.vector_store %arg6[%c0_20, %c0_21, %c0_22, %c0_23], %53 {strides = array<i32>} : memref<1x2x8x128xbf16, #tpu.memory_space<vmem>>, vector<1x1x8x128xbf16>,
    %54 = vector.extract_strided_slice %46 {offsets = [1, 0, 0], sizes = [1, 8, 128], strides = [1, 1, 1]} : vector<2x8x128xf32> to vector<1x8x128xf32>
    %55 = vector.extract_strided_slice %41 {offsets = [0, 1, 0, 0], sizes = [1, 1, 8, 128], strides = [1, 1, 1, 1]} : vector<2x2x8x128xf32> to vector<1x1x8x128xf32>
    %56 = vector.shape_cast %55 : vector<1x1x8x128xf32> to vector<1x8x128xf32>
    %57 = arith.maximumf %54, %56 : vector<1x8x128xf32>
    %58 = arith.truncf %57 : vector<1x8x128xf32> to vector<1x8x128xbf16>
    %c0_24 = arith.constant 0 : index
    %c1 = arith.constant 1 : index
    %c0_25 = arith.constant 0 : index
    %c0_26 = arith.constant 0 : index
    %59 = vector.load %arg6[%c0_24, %c1, %c0_25, %c0_26] : memref<1x2x8x128xbf16, #tpu.memory_space<vmem>>, vector<1x1x8x128xbf16>
    %60 = vector.shape_cast %59 : vector<1x1x8x128xbf16> to vector<1x8x128xbf16>
    %61 = vector.shape_cast %58 : vector<1x8x128xbf16> to vector<1x1x8x128xbf16>
    tpu.vector_store %arg6[%c0_24, %c1, %c0_25, %c0_26], %61 {strides = array<i32>} : memref<1x2x8x128xbf16, #tpu.memory_space<vmem>>, vector<1x1x8x128xbf16>,
    return
  }
  func.func @transform_0(%arg0: i32, %arg1: i32) -> (i32, i32, i32, i32) {
    %c0_i32 = arith.constant 0 : i32
    %c0_i32_0 = arith.constant 0 : i32
    %c0_i32_1 = arith.constant 0 : i32
    return %arg0, %arg1, %c0_i32, %c0_i32_0 : i32, i32, i32, i32
  }
  func.func @transform_1(%arg0: i32, %arg1: i32) -> (i32, i32, i32, i32) {
    %c0_i32 = arith.constant 0 : i32
    %c0_i32_0 = arith.constant 0 : i32
    %c0_i32_1 = arith.constant 0 : i32
    return %arg0, %arg1, %c0_i32, %c0_i32_0 : i32, i32, i32, i32
  }
  func.func @transform_2(%arg0: i32, %arg1: i32) -> (i32, i32) {
    %c0_i32 = arith.constant 0 : i32
    %c0_i32_0 = arith.constant 0 : i32
    %c0_i32_1 = arith.constant 0 : i32
    return %c0_i32, %c0_i32_0 : i32, i32
  }
  func.func @transform_3(%arg0: i32, %arg1: i32) -> (i32, i32) {
    %c0_i32 = arith.constant 0 : i32
    %c0_i32_0 = arith.constant 0 : i32
    %c0_i32_1 = arith.constant 0 : i32
    return %c0_i32, %c0_i32_0 : i32, i32
  }
  func.func @transform_4(%arg0: i32, %arg1: i32) -> (i32, i32, i32, i32) {
    %c0_i32 = arith.constant 0 : i32
    %c0_i32_0 = arith.constant 0 : i32
    %c0_i32_1 = arith.constant 0 : i32
    return %arg0, %arg1, %c0_i32, %c0_i32_0 : i32, i32, i32, i32
  }
}

</mosaic_0001>

<llo_original>
// kernel: base_stem_forward.1
$region0: #{base_stem_forward.1}
  #allocation0 [shape = 'u32[]', space=smem, size = 0x4, offset = 0x4, fixed_abs, tag = 'smem constant byte address 0x4 - core index']
  #allocation1 [shape = 'u32[72,128]{1,0:T(1,128)}', space=vmem, size = 0x9000, scoped, tag = 'internal scratch']
  %s0 = inlined_call_operand.vmem [shape: bf16[2,16,16,147], index: 0, kind: input, shape index: {}]
  %s1 = inlined_call_operand.vmem [shape: bf16[2,4,16,147], index: 1, kind: input, shape index: {}]
  %s2 = inlined_call_operand.vmem [shape: bf16[147,128], index: 2, kind: input, shape index: {}]
  %s3 = inlined_call_operand.vmem [shape: f32[1,128], index: 3, kind: input, shape index: {}]
  %s4 = inlined_call_operand.vmem [shape: bf16[2,8,8,128], index: 4, kind: output, shape index: {}]
  %s5 = sld [smem:[#allocation0]]
  $region49: #{base_stem_forward.1} parent=0
    _
  %s7 = ssub.s32 1, %s5
  %s8 = scalar_select 0, %s7, %s5
  loop: start=0, step=1, limit=10
  $region2: #{base_stem_forward.1} parent=0 // loop_pre_header
    _
  $region3: #{base_stem_forward.1} parent=0 // loop_header
    %s10 = sphi 0, %s14
    %p11 = scmp.ge.s32.totalorder %s10, 10
    %s17 = sphi 0, %s29
    %s18 = sphi 0, %s25
    %s19 = sphi 0, %s17
    %s20 = sphi 0, %s18
    %s21 = sphi 0, %s19
    %s22 = sphi 0, %s20
    %s34 = sphi 0, %s36
    %s37 = sphi 0, %s34
    %s38 = sphi 0, %s37
    %s54 = sphi 0, %s38
    %s62 = sphi 0, %s64
    %s65 = sphi 0, %s62
    %s66 = sphi 0, %s65
    %s82 = sphi 0, %s66
    %s86 = sphi 0, %s86
    %s88 = sphi 0, %s86
    %s89 = sphi 0, %s88
    %s103 = sphi 0, %s89
    %s107 = sphi 0, %s107
    %s109 = sphi 0, %s107
    %s110 = sphi 0, %s109
    %s124 = sphi 0, %s110
    %s132 = sphi 0, %s134
    %s135 = sphi 0, %s132
    %s136 = sphi 0, %s135
    %s152 = sphi 0, %s136
  $region4: #{base_stem_forward.1} parent=0 // loop_header_branch
    %13 = sbr.rel (%p11) target = $region8
  $region5: #{base_stem_forward.1} parent=0 // loop_body
    %s15 = ssub.s32 %s10, 1
    %s16 = ssub.s32 %s10, 2
    %s23 = sadd.s32 1, %s18
    %p24 = scmp.ge.s32.totalorder %s23, 4
    %s25 = scalar_select %p24, 0, %s23
    %s26 = sadd.s32 1, %s17
    %s27 = scalar_select %p24, %s26, %s17
    %p28 = scmp.ge.s32.totalorder %s27, 2
    %s29 = scalar_select %p28, 0, %s27
    %s30 = ssub.s32 %s17, %s29
    %s31 = ssub.s32 %s18, %s25
    %s32 = sor.u32 %s30, %s31
    %p33 = scmp.eq.s32.totalorder %s32, 0
    %s35 = sadd.s32 %s34, 1
    %s36 = scalar_select %p33, %s34, %s35
    %p39 = pneg %p33
    %p40 = scmp.eq.s32.totalorder %s10, 7
    %p41 = por %p39, %p40
    %p42 = scmp.ne.s32.totalorder %s34, %s37
    %p43 = scmp.eq.s32.totalorder %s10, 0
    %p44 = por %p42, %p43
    %p45 = scmp.ne.s32.totalorder %s34, %s37
    %p46 = scmp.eq.s32.totalorder %s15, 7
    %p47 = por %p45, %p46
    %p48 = scmp.ne.s32.totalorder %s37, %s38
    %p49 = scmp.eq.s32.totalorder %s15, 0
    %p50 = por %p48, %p49
    %p51 = scmp.ne.s32.totalorder %s37, %s38
    %p52 = scmp.eq.s32.totalorder %s16, 7
    %p53 = por %p51, %p52
    %p55 = scmp.ne.s32.totalorder %s38, %s54
    %p56 = scmp.eq.s32.totalorder %s16, 0
    %p57 = por %p55, %p56
    %s58 = ssub.s32 %s17, %s29
    %s59 = ssub.s32 %s18, %s25
    %s60 = sor.u32 %s58, %s59
    %p61 = scmp.eq.s32.totalorder %s60, 0
    %s63 = sadd.s32 %s62, 1
    %s64 = scalar_select %p61, %s62, %s63
    %p67 = pneg %p61
    %p68 = scmp.eq.s32.totalorder %s10, 7
    %p69 = por %p67, %p68
    %p70 = scmp.ne.s32.totalorder %s62, %s65
    %p71 = scmp.eq.s32.totalorder %s10, 0
    %p72 = por %p70, %p71
    %p73 = scmp.ne.s32.totalorder %s62, %s65
    %p74 = scmp.eq.s32.totalorder %s15, 7
    %p75 = por %p73, %p74
    %p76 = scmp.ne.s32.totalorder %s65, %s66
    %p77 = scmp.eq.s32.totalorder %s15, 0
    %p78 = por %p76, %p77
    %p79 = scmp.ne.s32.totalorder %s65, %s66
    %p80 = scmp.eq.s32.totalorder %s16, 7
    %p81 = por %p79, %p80
    %p83 = scmp.ne.s32.totalorder %s66, %s82
    %p84 = scmp.eq.s32.totalorder %s16, 0
    %p85 = por %p83, %p84
    %s87 = sadd.s32 %s86, 1
    %p90 = scmp.eq.s32.totalorder %s10, 7
    %p91 = scmp.ne.s32.totalorder %s86, %s88
    %p92 = scmp.eq.s32.totalorder %s10, 0
    %p93 = por %p91, %p92
    %p94 = scmp.ne.s32.totalorder %s86, %s88
    %p95 = scmp.eq.s32.totalorder %s15, 7
    %p96 = por %p94, %p95
    %p97 = scmp.ne.s32.totalorder %s88, %s89
    %p98 = scmp.eq.s32.totalorder %s15, 0
    %p99 = por %p97, %p98
    %p100 = scmp.ne.s32.totalorder %s88, %s89
    %p101 = scmp.eq.s32.totalorder %s16, 7
    %p102 = por %p100, %p101
    %p104 = scmp.ne.s32.totalorder %s89, %s103
    %p105 = scmp.eq.s32.totalorder %s16, 0
    %p106 = por %p104, %p105
    %s108 = sadd.s32 %s107, 1
    %p111 = scmp.eq.s32.totalorder %s10, 7
    %p112 = scmp.ne.s32.totalorder %s107, %s109
    %p113 = scmp.eq.s32.totalorder %s10, 0
    %p114 = por %p112, %p113
    %p115 = scmp.ne.s32.totalorder %s107, %s109
    %p116 = scmp.eq.s32.totalorder %s15, 7
    %p117 = por %p115, %p116
    %p118 = scmp.ne.s32.totalorder %s109, %s110
    %p119 = scmp.eq.s32.totalorder %s15, 0
    %p120 = por %p118, %p119
    %p121 = scmp.ne.s32.totalorder %s109, %s110
    %p122 = scmp.eq.s32.totalorder %s16, 7
    %p123 = por %p121, %p122
    %p125 = scmp.ne.s32.totalorder %s110, %s124
    %p126 = scmp.eq.s32.totalorder %s16, 0
    %p127 = por %p125, %p126
    %s128 = ssub.s32 %s17, %s29
    %s129 = ssub.s32 %s18, %s25
    %s130 = sor.u32 %s128, %s129
    %p131 = scmp.eq.s32.totalorder %s130, 0
    %s133 = sadd.s32 %s132, 1
    %s134 = scalar_select %p131, %s132, %s133
    %p137 = pneg %p131
    %p138 = scmp.eq.s32.totalorder %s10, 7
    %p139 = por %p137, %p138
    %p140 = scmp.ne.s32.totalorder %s132, %s135
    %p141 = scmp.eq.s32.totalorder %s10, 0
    %p142 = por %p140, %p141
    %p143 = scmp.ne.s32.totalorder %s132, %s135
    %p144 = scmp.eq.s32.totalorder %s15, 7
    %p145 = por %p143, %p144
    %p146 = scmp.ne.s32.totalorder %s135, %s136
    %p147 = scmp.eq.s32.totalorder %s15, 0
    %p148 = por %p146, %p147
    %p149 = scmp.ne.s32.totalorder %s135, %s136
    %p150 = scmp.eq.s32.totalorder %s16, 7
    %p151 = por %p149, %p150
    %p153 = scmp.ne.s32.totalorder %s136, %s152
    %p154 = scmp.eq.s32.totalorder %s16, 0
    %p155 = por %p153, %p154
    %p156 = scmp.le.s32.totalorder 1, %s10
    %p157 = scmp.lt.s32.totalorder %s10, 9
    %p158 = pnand %p156, %p157
    %p159 = pneg %p158
    // Predicated region
    $region9: #{base_stem_forward.1} parent=5 // pred_check
      _
    $region10: #{base_stem_forward.1} parent=5 // pred_check_branch
      %161 = sbr.rel (%p158) target = $region12
    $region11: #{base_stem_forward.1} parent=5 // pred_region
      %s162 = ssub.s32 %s10, 1
      // Predicated region
      $region13: #{base_stem_forward.1} parent=11 // pred_check
        %p163 = pneg %p99
      $region14: #{base_stem_forward.1} parent=11 // pred_check_branch
        %165 = sbr.rel (%p163) target = $region16
      $region15: #{base_stem_forward.1} parent=11 // pred_region
        _
      $region16: #{base_stem_forward.1} parent=11 // pred_fallthru
        _
      // Predicated region
      $region17: #{base_stem_forward.1} parent=11 // pred_check
        %p166 = pneg %p120
      $region18: #{base_stem_forward.1} parent=11 // pred_check_branch
        %168 = sbr.rel (%p166) target = $region20
      $region19: #{base_stem_forward.1} parent=11 // pred_region
        _
      $region20: #{base_stem_forward.1} parent=11 // pred_fallthru
        _
    $region12: #{base_stem_forward.1} parent=5 // pred_fallthru
      _
    %p169 = scmp.lt.s32.totalorder %s10, 8
    // Predicated region
    $region21: #{base_stem_forward.1} parent=5 // pred_check
      %p170 = pneg %p169
    $region22: #{base_stem_forward.1} parent=5 // pred_check_branch
      %172 = sbr.rel (%p170) target = $region24
    $region23: #{base_stem_forward.1} parent=5 // pred_region
      // Predicated region
      $region25: #{base_stem_forward.1} parent=23 // pred_check
        %p173 = pneg %p44
      $region26: #{base_stem_forward.1} parent=23 // pred_check_branch
        %175 = sbr.rel (%p173) target = $region28
      $region27: #{base_stem_forward.1} parent=23 // pred_region
        %s176 = smul.u32 4, %s18
        %p177 = scmp.lt.s32.totalorder %s17, 1
        %s178 = scalar_select %p177, %s17, 1
        %p179 = scmp.lt.s32.totalorder %s176, 15
        %s180 = scalar_select %p179, %s176, 15
        %s181 = smul.addr %s180, 4
        %s182 = smul.addr %s178, 64
        %s183 = sadd.s32 %s181, %s182
        %s184 = smul.addr %s183, 4
        %s185 = scalar_lea.vmem %s0, %s184
        %s186 = smul.u32 4, %s18
      $region28: #{base_stem_forward.1} parent=23 // pred_fallthru
        _
      // Predicated region
      $region29: #{base_stem_forward.1} parent=23 // pred_check
        %p187 = pneg %p72
      $region30: #{base_stem_forward.1} parent=23 // pred_check_branch
        %189 = sbr.rel (%p187) target = $region32
      $region31: #{base_stem_forward.1} parent=23 // pred_region
        %p190 = scmp.lt.s32.totalorder %s17, 1
        %s191 = scalar_select %p190, %s17, 1
        %p192 = scmp.lt.s32.totalorder %s18, 3
        %s193 = scalar_select %p192, %s18, 3
        %s194 = smul.addr %s193, 4
        %s195 = smul.addr %s191, 16
        %s196 = sadd.s32 %s194, %s195
        %s197 = smul.addr %s196, 4
        %s198 = scalar_lea.vmem %s1, %s197
      $region32: #{base_stem_forward.1} parent=23 // pred_fallthru
        _
    $region24: #{base_stem_forward.1} parent=5 // pred_fallthru
      _
    %p199 = scmp.le.s32.totalorder 1, %s10
    %p200 = scmp.lt.s32.totalorder %s10, 9
    %p201 = pnand %p199, %p200
    %p202 = pneg %p201
    // Predicated region
    $region33: #{base_stem_forward.1} parent=5 // pred_check
      _
    $region34: #{base_stem_forward.1} parent=5 // pred_check_branch
      %204 = sbr.rel (%p201) target = $region36
    $region35: #{base_stem_forward.1} parent=5 // pred_region
      %s205 = ssub.s32 %s10, 1
      %s206 = smul.u32 4, %s20
      %p207 = scmp.lt.s32.totalorder %s19, 1
      %s208 = scalar_select %p207, %s19, 1
      %p209 = scmp.lt.s32.totalorder %s206, 15
      %s210 = scalar_select %p209, %s206, 15
      %s211 = smul.addr %s210, 4
      %s212 = smul.addr %s208, 64
      %s213 = sadd.s32 %s211, %s212
      %s214 = smul.addr %s213, 4
      %s215 = scalar_lea.vmem %s0, %s214
      %p216 = pneg %p50
      %p217 = pneg %p47
      %p218 = scmp.lt.s32.totalorder %s19, 1
      %s219 = scalar_select %p218, %s19, 1
      %p220 = scmp.lt.s32.totalorder %s20, 3
      %s221 = scalar_select %p220, %s20, 3
      %s222 = smul.addr %s221, 4
      %s223 = smul.addr %s219, 16
      %s224 = sadd.s32 %s222, %s223
      %s225 = smul.addr %s224, 4
      %s226 = scalar_lea.vmem %s1, %s225
      %p227 = pneg %p78
      %p228 = pneg %p75
      %p229 = pneg %p99
      %p230 = pneg %p96
      %p231 = pneg %p120
      %p232 = pneg %p117
      %p233 = pneg %p148
      %p234 = pneg %p145
      %s235 = smul.u32 2, %s20
      %p236 = scmp.lt.s32.totalorder %s19, 1
      %s237 = scalar_select %p236, %s19, 1
      %p238 = scmp.lt.s32.totalorder %s235, 7
      %s239 = scalar_select %p238, %s235, 7
      %s240 = smul.addr %s237, 8
      %s241 = sadd.s32 %s239, %s240
      %s242 = smul.addr %s241, 4
      %s243 = scalar_lea.vmem %s4, %s242
      %s244 = smul.u32 4, %s20
      %p245 = scmp.lt.s32.totalorder %s19, 1
      %s246 = scalar_select %p245, %s19, 1
      %p247 = scmp.lt.s32.totalorder %s244, 15
      %s248 = scalar_select %p247, %s244, 15
      %s249 = smul.addr %s248, 4
      %s250 = smul.addr %s246, 64
      %s251 = sadd.s32 %s249, %s250
      %s252 = smul.addr %s251, 4
      %s253 = scalar_lea.vmem %s0, %s252
      %s254 = smul.u32 4, %s20
      %p255 = scmp.lt.s32.totalorder %s19, 1
      %s256 = scalar_select %p255, %s19, 1
      %p257 = scmp.lt.s32.totalorder %s20, 3
      %s258 = scalar_select %p257, %s20, 3
      %s259 = smul.addr %s258, 4
      %s260 = smul.addr %s256, 16
      %s261 = sadd.s32 %s259, %s260
      %s262 = smul.addr %s261, 4
      %s263 = scalar_lea.vmem %s1, %s262
      %s264 = smul.u32 2, %s20
      %p265 = scmp.lt.s32.totalorder %s19, 1
      %s266 = scalar_select %p265, %s19, 1
      %p267 = scmp.lt.s32.totalorder %s264, 7
      %s268 = scalar_select %p267, %s264, 7
      %s269 = smul.addr %s266, 8
      %s270 = sadd.s32 %s268, %s269
      %s271 = smul.addr %s270, 4
      %s272 = scalar_lea.vmem %s4, %s271
      %s273 = smul.u32 2, %s20
      %v275 = vld [vmem:[%s2] sm:$0xf]
      %v276 = vld [vmem:[%s2 + $0x4] sm:$0xf]
      %v277 = vld [vmem:[%s2 + $0x8] sm:$0xf]
      %v278 = vld [vmem:[%s2 + $0xc] sm:$0xf]
      %v279 = vld [vmem:[%s2 + $0x10] sm:$0xf]
      %v280 = vld [vmem:[%s2 + $0x14] sm:$0xf]
      %v281 = vld [vmem:[%s2 + $0x18] sm:$0xf]
      %v282 = vld [vmem:[%s2 + $0x1c] sm:$0xf]
      %v283 = vld [vmem:[%s2 + $0x20] sm:$0xf]
      %v284 = vld [vmem:[%s2 + $0x24] sm:$0xf]
      %v285 = vld [vmem:[%s2 + $0x28] sm:$0xf]
      %v286 = vld [vmem:[%s2 + $0x2c] sm:$0xf]
      %v287 = vld [vmem:[%s2 + $0x30] sm:$0xf]
      %v288 = vld [vmem:[%s2 + $0x34] sm:$0xf]
      %v289 = vld [vmem:[%s2 + $0x38] sm:$0xf]
      %v290 = vld [vmem:[%s2 + $0x3c] sm:$0xf]
      %v291 = vld [vmem:[%s2 + $0x40] sm:$0xf]
      %v292 = vld [vmem:[%s2 + $0x44] sm:$0xf]
      %v293 = vld [vmem:[%s2 + $0x48] sm:$0x3]
      %v294 = vld [vmem:[%s3] sm:$0x1]
      %v295 = vld [vmem:[%s253] sm:$0xff]
      %v296 = vld [vmem:[%s253 + $0x8] sm:$0xff]
      %v297 = vld [vmem:[%s253 + $0x10] sm:$0xff]
      %v298 = vld [vmem:[%s253 + $0x18] sm:$0xff]
      %v299 = vld [vmem:[%s253 + $0x20] sm:$0xff]
      %v300 = vld [vmem:[%s253 + $0x28] sm:$0xff]
      %v301 = vld [vmem:[%s253 + $0x30] sm:$0xff]
      %v302 = vld [vmem:[%s253 + $0x38] sm:$0xff]
      %v304 = vperm.slane %v294, 0
      %v314 = vunpack.c.l.b16 %v295
      %v315 = vunpack.c.h.b16 %v295
      %v316 = vunpack.c.l.b16 %v296
      %v317 = vunpack.c.h.b16 %v296
      %v318 = vunpack.c.l.b16 %v297
      %v319 = vunpack.c.h.b16 %v297
      %v320 = vunpack.c.l.b16 %v298
      %v321 = vunpack.c.h.b16 %v298
      %v322 = vunpack.c.l.b16 %v299
      %v323 = vunpack.c.h.b16 %v299
      %v324 = vunpack.c.l.b16 %v300
      %v325 = vunpack.c.h.b16 %v300
      %v326 = vunpack.c.l.b16 %v301
      %v327 = vunpack.c.h.b16 %v301
      %v328 = vunpack.c.l.b16 %v302
      %v329 = vunpack.c.h.b16 %v302
      %v330 = vpack.c.b16 %v316, %v314
      %v331 = vpack.c.b16 %v317, %v315
      %v332 = vpack.c.b16 %v320, %v318
      %v333 = vpack.c.b16 %v321, %v319
      %v334 = vpack.c.b16 %v324, %v322
      %v335 = vpack.c.b16 %v325, %v323
      %v336 = vpack.c.b16 %v328, %v326
      %v337 = vpack.c.b16 %v329, %v327
      %v361 = vunpack.c.l.b16 %v275
      %v362 = vunpack.c.l.b16 %v276
      %v363 = vunpack.c.l.b16 %v277
      %v364 = vunpack.c.l.b16 %v278
      %v365 = vunpack.c.l.b16 %v279
      %v366 = vunpack.c.l.b16 %v280
      %v367 = vunpack.c.l.b16 %v281
      %v368 = vunpack.c.l.b16 %v282
      %v369 = vunpack.c.l.b16 %v283
      %v370 = vunpack.c.l.b16 %v284
      %v371 = vunpack.c.l.b16 %v285
      %v372 = vunpack.c.l.b16 %v286
      %v373 = vunpack.c.l.b16 %v287
      %v374 = vunpack.c.l.b16 %v288
      %v375 = vunpack.c.l.b16 %v289
      %v376 = vunpack.c.l.b16 %v290
      %v377 = vunpack.c.l.b16 %v291
      %v378 = vunpack.c.l.b16 %v292
      %v379 = vunpack.c.l.b16 %v293
      %v380 = vpack.c.b16 %v362, %v361
      %v381 = vpack.c.b16 %v364, %v363
      %v382 = vpack.c.b16 %v366, %v365
      %v383 = vpack.c.b16 %v368, %v367
      %v384 = vpack.c.b16 %v370, %v369
      %v385 = vpack.c.b16 %v372, %v371
      %v386 = vpack.c.b16 %v374, %v373
      %v387 = vpack.c.b16 %v376, %v375
      %v388 = vpack.c.b16 %v378, %v377
      %v389 = vpack.c.b16 %v379, %v379
      %vm399 = vcmask 154624
      %v401 = vsel %vm399, %v331, 0
      %v404 = vsel %vm399, %v333, 0
      %v407 = vsel %vm399, %v335, 0
      %v410 = vsel %vm399, %v337, 0
      %vm412 = vcmask 1040384
      %vm413 = vcmask 1041408
      %v414 = vsel %vm412, 4294967295, 65535
      %v415 = vsel %vm413, %v414, 0
      %v417 = vand.u32 %v389, %v415
      %419 = vmatpush.bf16.msra.mxu0 %v387
      %420 = vmatpush.bf16.msra.mxu0 %v386
      %421 = vmatpush.bf16.msra.mxu0 %v385
      %422 = vmatpush.bf16.msra.mxu0 %v384
      %423 = vmatpush.bf16.msra.mxu0 %v383
      %424 = vmatpush.bf16.msra.mxu0 %v382
      %425 = vmatpush.bf16.msra.mxu0 %v381
      %426 = vmatpush.bf16.msra.mxu0 %v380
      %427 = vmatmul.bf16.gmra.mxu0 %v330
      %v428 = vpop.f32.mrf.mxu0
      %v429 = vadd.f32 %v304, %v428
      %v430 = vpop.f32.mrf.mxu0
      %v431 = vadd.f32 %v304, %v430
      %432 = vmatmul.bf16.gmra.mxu0 %v332
      %v433 = vpop.f32.mrf.mxu0
      %v434 = vadd.f32 %v304, %v433
      %v435 = vpop.f32.mrf.mxu0
      %v436 = vadd.f32 %v304, %v435
      %437 = vmatmul.bf16.gmra.mxu0 %v334
      %v438 = vpop.f32.mrf.mxu0
      %v439 = vadd.f32 %v304, %v438
      %v440 = vpop.f32.mrf.mxu0
      %v441 = vadd.f32 %v304, %v440
      %442 = vmatmul.bf16.gmra.mxu0 %v336
      %v443 = vpop.f32.mrf.mxu0
      %v444 = vadd.f32 %v304, %v443
      %v445 = vpop.f32.mrf.mxu0
      %v446 = vadd.f32 %v304, %v445
      %447 = vdwg.mxu0
      %448 = vmatpush.bf16.msra.mxu0 0
      %449 = vmatpush.bf16.msra.mxu0 0
      %450 = vmatpush.bf16.msra.mxu0 0
      %451 = vmatpush.bf16.msra.mxu0 0
      %452 = vmatpush.bf16.msra.mxu0 0
      %453 = vmatpush.bf16.msra.mxu0 0
      %454 = vmatpush.bf16.msra.mxu0 %v417
      %455 = vmatpush.bf16.msra.mxu0 %v388
      %456 = vmatmul.bf16.gmra.mxu0 %v401
      %v457 = vpop.f32.mrf.mxu0
      %v458 = vadd.f32 %v429, %v457
      %v459 = vpop.f32.mrf.mxu0
      %v460 = vadd.f32 %v431, %v459
      %461 = vmatmul.bf16.gmra.mxu0 %v404
      %v462 = vpop.f32.mrf.mxu0
      %v463 = vadd.f32 %v434, %v462
      %v464 = vpop.f32.mrf.mxu0
      %v465 = vadd.f32 %v436, %v464
      %466 = vmatmul.bf16.gmra.mxu0 %v407
      %v467 = vpop.f32.mrf.mxu0
      %v468 = vadd.f32 %v439, %v467
      %v469 = vpop.f32.mrf.mxu0
      %v470 = vadd.f32 %v441, %v469
      %471 = vmatmul.bf16.gmra.mxu0 %v410
      %v472 = vpop.f32.mrf.mxu0
      %v473 = vadd.f32 %v444, %v472
      %v474 = vpop.f32.mrf.mxu0
      %v475 = vadd.f32 %v446, %v474
      %476 = vdwg.mxu0
      %v477 = vmax.f32 %v458, 0.0
      %v478 = vmax.f32 %v460, 0.0
      %v479 = vmax.f32 %v463, 0.0
      %v480 = vmax.f32 %v465, 0.0
      %v481 = vmax.f32 %v468, 0.0
      %v482 = vmax.f32 %v470, 0.0
      %v483 = vmax.f32 %v473, 0.0
      %v484 = vmax.f32 %v475, 0.0
      %v485 = vlaneseq
      %v486 = vshrl.u32 %v485, 7
      %vm487 = vcmp.eq.s32.totalorder %v486, 0
      %v488 = vrot.slane %v478, 7
      %v489 = vrot.slane %v480, 7
      %v490 = vrot.slane %v482, 7
      %v491 = vrot.slane %v484, 7
      %v492 = vsel %vm487, 0.0, %v488
      %v493 = vsel %vm487, 0.0, %v489
      %v494 = vsel %vm487, 0.0, %v490
      %v495 = vsel %vm487, 0.0, %v491
      %v496 = vmax.f32 %v477, %v478
      %v497 = vmax.f32 %v479, %v480
      %v498 = vmax.f32 %v481, %v482
      %v499 = vmax.f32 %v483, %v484
      %v500 = vmax.f32 %v496, %v492
      %v501 = vmax.f32 %v497, %v493
      %v502 = vmax.f32 %v498, %v494
      %v503 = vmax.f32 %v499, %v495
      %v504 = vld [vmem:[%s263] sm:$0xff]
      %v505 = vld [vmem:[%s263 + $0x8] sm:$0xff]
      %v508 = vunpack.c.l.b16 %v504
      %v509 = vunpack.c.h.b16 %v504
      %v510 = vunpack.c.l.b16 %v505
      %v511 = vunpack.c.h.b16 %v505
      %v512 = vpack.c.b16 %v510, %v508
      %v513 = vpack.c.b16 %v511, %v509
      %v516 = vsel %vm399, %v513, 0
      %518 = vmatpush.bf16.msra.mxu0 %v387
      %519 = vmatpush.bf16.msra.mxu0 %v386
      %520 = vmatpush.bf16.msra.mxu0 %v385
      %521 = vmatpush.bf16.msra.mxu0 %v384
      %522 = vmatpush.bf16.msra.mxu0 %v383
      %523 = vmatpush.bf16.msra.mxu0 %v382
      %524 = vmatpush.bf16.msra.mxu0 %v381
      %525 = vmatpush.bf16.msra.mxu0 %v380
      %526 = vmatmul.bf16.gmra.mxu0 %v512
      %v527 = vpop.f32.mrf.mxu0
      %v528 = vadd.f32 %v304, %v527
      %v529 = vpop.f32.mrf.mxu0
      %v530 = vadd.f32 %v304, %v529
      %531 = vdwg.mxu0
      %532 = vmatpush.bf16.msra.mxu0 0
      %533 = vmatpush.bf16.msra.mxu0 0
      %534 = vmatpush.bf16.msra.mxu0 0
      %535 = vmatpush.bf16.msra.mxu0 0
      %536 = vmatpush.bf16.msra.mxu0 0
      %537 = vmatpush.bf16.msra.mxu0 0
      %538 = vmatpush.bf16.msra.mxu0 %v417
      %539 = vmatpush.bf16.msra.mxu0 %v388
      %540 = vmatmul.bf16.gmra.mxu0 %v516
      %v541 = vpop.f32.mrf.mxu0
      %v542 = vadd.f32 %v528, %v541
      %v543 = vpop.f32.mrf.mxu0
      %v544 = vadd.f32 %v530, %v543
      %545 = vdwg.mxu0
      %v546 = vmax.f32 %v542, 0.0
      %v547 = vmax.f32 %v544, 0.0
      %p548 = scmp.eq.s32.totalorder %s20, 0
      %v549 = vrot.slane %v547, 7
      %v550 = vsel %vm487, 0.0, %v549
      %v551 = vmax.f32 %v546, %v547
      %v552 = vmax.f32 %v551, %v550
      %s553 = scalar_select %p548, 1, 0
      %v554 = vstv %s553
      %vm555 = vcmp.eq.s32.totalorder %v554, 1
      %v556 = vsel %vm555, 0.0, %v552
      %v557 = vmax.f32 %v500, %v501
      %v558 = vmax.f32 %v502, %v503
      %v559 = vmax.f32 %v557, %v556
      %v560 = vpack.c.bf16 %v559, %v559
      %561 = vst [vmem:[%s272] sm:$0xf] %v560
      %v562 = vmax.f32 %v558, %v501
      %v563 = vpack.c.bf16 %v562, %v562
      %s564 = scalar_lea.vmem %s272, 4
      %565 = vst [vmem:[%s564] sm:$0xf] %v563
      %s566 = smul.u32 2, %s20
      %p567 = scmp.lt.s32.totalorder %s19, 1
      %s568 = scalar_select %p567, %s19, 1
      %p569 = scmp.lt.s32.totalorder %s566, 7
      %s570 = scalar_select %p569, %s566, 7
      %s571 = smul.addr %s568, 8
      %s572 = sadd.s32 %s570, %s571
      %s573 = smul.addr %s572, 4
      %s574 = scalar_lea.vmem %s4, %s573
      // Predicated region
      $region37: #{base_stem_forward.1} parent=35 // pred_check
        %p575 = pneg %p145
      $region38: #{base_stem_forward.1} parent=35 // pred_check_branch
        %577 = sbr.rel (%p575) target = $region40
      $region39: #{base_stem_forward.1} parent=35 // pred_region
        %s578 = smul.u32 2, %s20
      $region40: #{base_stem_forward.1} parent=35 // pred_fallthru
        _
    $region36: #{base_stem_forward.1} parent=5 // pred_fallthru
      _
    %p579 = scmp.le.s32.totalorder 2, %s10
    // Predicated region
    $region41: #{base_stem_forward.1} parent=5 // pred_check
      %p580 = pneg %p579
    $region42: #{base_stem_forward.1} parent=5 // pred_check_branch
      %582 = sbr.rel (%p580) target = $region44
    $region43: #{base_stem_forward.1} parent=5 // pred_region
      %s583 = ssub.s32 %s10, 2
      // Predicated region
      $region45: #{base_stem_forward.1} parent=43 // pred_check
        %p584 = pneg %p151
      $region46: #{base_stem_forward.1} parent=43 // pred_check_branch
        %586 = sbr.rel (%p584) target = $region48
      $region47: #{base_stem_forward.1} parent=43 // pred_region
        %s587 = smul.u32 2, %s22
        %p588 = scmp.lt.s32.totalorder %s21, 1
        %s589 = scalar_select %p588, %s21, 1
        %p590 = scmp.lt.s32.totalorder %s587, 7
        %s591 = scalar_select %p590, %s587, 7
        %s592 = smul.addr %s589, 8
        %s593 = sadd.s32 %s591, %s592
        %s594 = smul.addr %s593, 4
        %s595 = scalar_lea.vmem %s4, %s594
      $region48: #{base_stem_forward.1} parent=43 // pred_fallthru
        _
    $region44: #{base_stem_forward.1} parent=5 // pred_fallthru
      _
  $region6: #{base_stem_forward.1} parent=0 // loop_footer
    %s14 = sadd.s32 1, %s10
  $region7: #{base_stem_forward.1} parent=0 // loop_footer_branch
    %9 = sbr.rel target = $region3
  $region8: #{base_stem_forward.1} parent=0 // loop_exit
    _

</llo_original>
